<compile_context>
chip_gen: v7x
topology: tpu7x:2x2x1
jax: 0.10.0
libtpu: 0.0.40
codegen_flags: <defaults>
</compile_context>

<pallas_src>
import functools

import jax
import jax.numpy as jnp
from jax.experimental import pallas as pl
from jax.experimental.pallas import tpu as pltpu


def _round_up(x, m):
    return ((x + m - 1) // m) * m


def _sim_kernel(f_ref, w_ref, b_ref, o_ref, *, d_pad):
    f = f_ref[...]                                              # (TILE_N, D_pad) f32

    # Fused matmul: both linears in a single MXU pass; weights pre-transposed
    # in the wrapper so the contraction is on in_features (no in-kernel .T).
    z = jnp.dot(f, w_ref[...], preferred_element_type=jnp.float32)
    z = z + b_ref[...]                                          # single broadcast add

    z1 = z[:, :d_pad]                                           # 128-aligned static slices
    z2 = z[:, d_pad:]

    def _softmax(x):
        m = jnp.max(x, axis=-1, keepdims=True)
        e = jnp.exp(x - m)
        s = jnp.sum(e, axis=-1, keepdims=True)
        return e * pl.reciprocal(s, approx=True)                # EUP vrcp

    out = f + _softmax(z1) + _softmax(z2)
    o_ref[...] = out.astype(o_ref.dtype)


def sim_forward(f, w1, b1, w2, b2, *, tile_n_max=512):
    """f: (N, D) float32; w1/w2: (D, D) nn.Linear layout (out, in); b1/b2: (D,)."""
    n, d = f.shape
    d_pad = _round_up(max(d, 128), 128)                 # lane-dense feature dim
    tile_n = min(tile_n_max, _round_up(n, 8))           # rows per grid step (mult of 8)
    n_pad = _round_up(n, tile_n)

    # Zero-pad the input: extra feature columns hit zero weight rows (exact),
    # extra rows are sliced off at the end.
    f_p = jnp.zeros((n_pad, d_pad), f.dtype).at[:n, :d].set(f)

    # Fused, pre-transposed weights: column block [0, D) is W1.T, block
    # [D_pad, D_pad + D) is W2.T.  Padded rows/cols are zero.
    w_cat = jnp.zeros((d_pad, 2 * d_pad), jnp.float32)
    w_cat = w_cat.at[:d, :d].set(w1.T.astype(jnp.float32))
    w_cat = w_cat.at[:d, d_pad:d_pad + d].set(w2.T.astype(jnp.float32))

    # Fused bias; padded lanes get -1e30 so exp() underflows to 0 and the
    # softmax over the padded width equals the softmax over the real D lanes.
    b_cat = jnp.full((1, 2 * d_pad), jnp.float32(-1e30), jnp.float32)
    b_cat = b_cat.at[0, :d].set(b1.astype(jnp.float32))
    b_cat = b_cat.at[0, d_pad:d_pad + d].set(b2.astype(jnp.float32))

    grid = (n_pad // tile_n,)
    kernel = functools.partial(_sim_kernel, d_pad=d_pad)

    out_p = pl.pallas_call(
        kernel,
        out_shape=jax.ShapeDtypeStruct((n_pad, d_pad), f.dtype),
        grid_spec=pltpu.PrefetchScalarGridSpec(
            num_scalar_prefetch=0,
            grid=grid,
            in_specs=[
                pl.BlockSpec((tile_n, d_pad), lambda i: (i, 0)),      # f rows stream
                pl.BlockSpec((d_pad, 2 * d_pad), lambda i: (0, 0)),   # fused weights (resident)
                pl.BlockSpec((1, 2 * d_pad), lambda i: (0, 0)),       # fused bias (resident)
            ],
            out_specs=pl.BlockSpec((tile_n, d_pad), lambda i: (i, 0)),
        ),
        compiler_params=pltpu.CompilerParams(
            dimension_semantics=("parallel",),   # shard row grid across TCs (v7x)
        ),
    )(f_p, w_cat, b_cat)

    return out_p[:n, :d]


def sim_reference(f, w1, b1, w2, b2):
    z1 = f @ w1.T + b1
    z2 = f @ w2.T + b2
    return f + jax.nn.softmax(z1, axis=-1) + jax.nn.softmax(z2, axis=-1)


if __name__ == "__main__":
    key = jax.random.PRNGKey(0)
    N, D = 8, 32                      # numrows, input_dim (small, consistent shapes)

    k_f, k_w1, k_w2 = jax.random.split(key, 3)
    f = jax.random.normal(k_f, (N, D), dtype=jnp.float32)

    # Deterministic parameter init matching SIM.reset_parameters():
    #   weights = ones, biases = zeros.
    w1 = jnp.ones((D, D), dtype=jnp.float32)
    b1 = jnp.zeros((D,), dtype=jnp.float32)
    w2 = jnp.ones((D, D), dtype=jnp.float32)
    b2 = jnp.zeros((D,), dtype=jnp.float32)

    out = sim_forward(f, w1, b1, w2, b2)
    out = jax.block_until_ready(out)
    ref = sim_reference(f, w1, b1, w2, b2)
    assert out.shape == (N, D)
    assert jnp.allclose(out, ref, atol=1e-3, rtol=1e-3), "mismatch vs reference (ones init)"

    # Extra sanity check with non-trivial weights (general correctness of the
    # fused / padded formulation).
    w1r = jax.random.normal(k_w1, (D, D), dtype=jnp.float32) * 0.1
    w2r = jax.random.normal(k_w2, (D, D), dtype=jnp.float32) * 0.1
    b1r = jnp.linspace(-0.5, 0.5, D, dtype=jnp.float32)
    b2r = jnp.linspace(0.5, -0.5, D, dtype=jnp.float32)
    out_r = jax.block_until_ready(sim_forward(f, w1r, b1r, w2r, b2r))
    ref_r = sim_reference(f, w1r, b1r, w2r, b2r)
    assert jnp.allclose(out_r, ref_r, atol=1e-3, rtol=1e-3), "mismatch vs reference (random init)"

    print("KERNEL_OK")
</pallas_src>

<mosaic_0001>
module attributes {stable_mosaic.version = 11 : i64} {
  func.func @_sim_kernel(%arg0: i32, %arg1: memref<8x128xf32, #tpu.memory_space<vmem>>, %arg2: memref<128x256xf32, #tpu.memory_space<vmem>>, %arg3: memref<1x256xf32, #tpu.memory_space<vmem>>, %arg4: memref<8x128xf32, #tpu.memory_space<vmem>>) attributes {dimension_semantics = [#tpu.dimension_semantics<parallel>], iteration_bounds = array<i64: 1>, scalar_prefetch = 0 : i64, scratch_operands = 0 : i64, tpu.core_type = #tpu.core_type<tc>, window_params = [{transform_indices = @transform_0, window_bounds = array<i64: 8, 128>}, {pipeline_mode = #tpu.pipeline_mode<synchronous>, transform_indices = @transform_1, window_bounds = array<i64: 128, 256>}, {pipeline_mode = #tpu.pipeline_mode<synchronous>, transform_indices = @transform_2, window_bounds = array<i64: 1, 256>}, {transform_indices = @transform_3, window_bounds = array<i64: 8, 128>}]} {
    %c0 = arith.constant 0 : index
    %c0_0 = arith.constant 0 : index
    %0 = vector.load %arg1[%c0, %c0_0] : memref<8x128xf32, #tpu.memory_space<vmem>>, vector<8x128xf32>
    %c0_1 = arith.constant 0 : index
    %c0_2 = arith.constant 0 : index
    %1 = vector.load %arg2[%c0_1, %c0_2] : memref<128x256xf32, #tpu.memory_space<vmem>>, vector<128x256xf32>
    %cst = arith.constant dense<0.000000e+00> : vector<8x256xf32>
    %2 = tpu.matmul %0, %1, %cst {dimension_numbers = #tpu.dot_dimension_numbers<[1], [0], [0], [1], [0, 0, 1, 1], [], []>} : vector<8x128xf32>, vector<128x256xf32>, vector<8x256xf32> -> vector<8x256xf32>
    %c0_3 = arith.constant 0 : index
    %c0_4 = arith.constant 0 : index
    %3 = vector.load %arg3[%c0_3, %c0_4] : memref<1x256xf32, #tpu.memory_space<vmem>>, vector<1x256xf32>
    %4 = vector.broadcast %3 : vector<1x256xf32> to vector<8x256xf32>
    %5 = arith.addf %2, %4 : vector<8x256xf32>
    %6 = vector.extract_strided_slice %5 {offsets = [0, 0], sizes = [8, 128], strides = [1, 1]} : vector<8x256xf32> to vector<8x128xf32>
    %7 = vector.extract_strided_slice %5 {offsets = [0, 128], sizes = [8, 128], strides = [1, 1]} : vector<8x256xf32> to vector<8x128xf32>
    %cst_5 = arith.constant dense<0xFF800000> : vector<8xf32>
    %8 = vector.multi_reduction <maximumf>, %6, %cst_5 [1] : vector<8x128xf32> to vector<8xf32>
    %9 = vector.shape_cast %8 : vector<8xf32> to vector<8x1xf32>
    %10 = vector.broadcast %9 : vector<8x1xf32> to vector<8x128xf32>
    %11 = arith.subf %6, %10 : vector<8x128xf32>
    %12 = math.exp %11 : vector<8x128xf32>
    %cst_6 = arith.constant dense<0.000000e+00> : vector<8xf32>
    %13 = vector.multi_reduction <add>, %12, %cst_6 [1] : vector<8x128xf32> to vector<8xf32>
    %14 = vector.shape_cast %13 : vector<8xf32> to vector<8x1xf32>
    %15 = tpu.reciprocal %14 {approx = true} : vector<8x1xf32> -> vector<8x1xf32>
    %16 = vector.broadcast %15 : vector<8x1xf32> to vector<8x128xf32>
    %17 = arith.mulf %12, %16 : vector<8x128xf32>
    %18 = arith.addf %0, %17 : vector<8x128xf32>
    %cst_7 = arith.constant dense<0xFF800000> : vector<8xf32>
    %19 = vector.multi_reduction <maximumf>, %7, %cst_7 [1] : vector<8x128xf32> to vector<8xf32>
    %20 = vector.shape_cast %19 : vector<8xf32> to vector<8x1xf32>
    %21 = vector.broadcast %20 : vector<8x1xf32> to vector<8x128xf32>
    %22 = arith.subf %7, %21 : vector<8x128xf32>
    %23 = math.exp %22 : vector<8x128xf32>
    %cst_8 = arith.constant dense<0.000000e+00> : vector<8xf32>
    %24 = vector.multi_reduction <add>, %23, %cst_8 [1] : vector<8x128xf32> to vector<8xf32>
    %25 = vector.shape_cast %24 : vector<8xf32> to vector<8x1xf32>
    %26 = tpu.reciprocal %25 {approx = true} : vector<8x1xf32> -> vector<8x1xf32>
    %27 = vector.broadcast %26 : vector<8x1xf32> to vector<8x128xf32>
    %28 = arith.mulf %23, %27 : vector<8x128xf32>
    %29 = arith.addf %18, %28 : vector<8x128xf32>
    %c0_9 = arith.constant 0 : index
    %c0_10 = arith.constant 0 : index
    %30 = vector.load %arg4[%c0_9, %c0_10] : memref<8x128xf32, #tpu.memory_space<vmem>>, vector<8x128xf32>
    tpu.vector_store %arg4[%c0_9, %c0_10], %29 {strides = array<i32>} : memref<8x128xf32, #tpu.memory_space<vmem>>, vector<8x128xf32>,
    return
  }
  func.func @transform_0(%arg0: i32) -> (i32, i32) {
    %c0_i32 = arith.constant 0 : i32
    %c0_i32_0 = arith.constant 0 : i32
    return %arg0, %c0_i32 : i32, i32
  }
  func.func @transform_1(%arg0: i32) -> (i32, i32) {
    %c0_i32 = arith.constant 0 : i32
    %c0_i32_0 = arith.constant 0 : i32
    %c0_i32_1 = arith.constant 0 : i32
    return %c0_i32, %c0_i32_0 : i32, i32
  }
  func.func @transform_2(%arg0: i32) -> (i32, i32) {
    %c0_i32 = arith.constant 0 : i32
    %c0_i32_0 = arith.constant 0 : i32
    %c0_i32_1 = arith.constant 0 : i32
    return %c0_i32, %c0_i32_0 : i32, i32
  }
  func.func @transform_3(%arg0: i32) -> (i32, i32) {
    %c0_i32 = arith.constant 0 : i32
    %c0_i32_0 = arith.constant 0 : i32
    return %arg0, %c0_i32 : i32, i32
  }
}

</mosaic_0001>

<llo_original>
// kernel: tpu_custom_call.1
$region0: #{tpu_custom_call.1}
  #allocation0 [shape = 'u32[]', space=smem, size = 0x4, offset = 0x4, fixed_abs, tag = 'smem constant byte address 0x4 - core index']
  #allocation1 [shape = 'u32[144,128]{1,0:T(1,128)}', space=vmem, size = 0x12000, scoped, tag = 'internal scratch']
  %s0 = inlined_call_operand.hbm [shape: f32[8,128], index: 0, kind: input, shape index: {}]
  %s1 = inlined_call_operand.hbm [shape: f32[128,256], index: 1, kind: input, shape index: {}]
  %s2 = inlined_call_operand.vmem [shape: f32[1,256], index: 2, kind: input, shape index: {}]
  %s3 = inlined_call_operand.hbm [shape: f32[8,128], index: 3, kind: output, shape index: {}]
  %s4 = sld [smem:[#allocation0]]
  $region30: #{tpu_custom_call.1} parent=0
    _
  %s6 = ssub.s32 1, %s4
  %s7 = scalar_select 0, %s6, %s4
  $region1: #{tpu_custom_call.1} parent=0
    #allocation2 [shape = 'u8[4096]{0}', space=vmem, size = 0x1000, scoped, tag = 'input window, operand 0, single buffered']
    #allocation3 [shape = 's32[1]{0}', space=sflag, size = 0x4, scoped, tag = 'scoped memory for tpu_custom_call.1']
    #allocation4 [shape = 's32[1]{0}', space=sflag, size = 0x4, scoped, tag = 'scoped memory for tpu_custom_call.1']
    #allocation5 [shape = 'u8[131072]{0}', space=vmem, size = 0x20000, scoped, tag = 'input window, operand 1, single buffered']
    #allocation6 [shape = 's32[1]{0}', space=sflag, size = 0x4, scoped, tag = 'scoped memory for tpu_custom_call.1']
    #allocation7 [shape = 'u8[4096]{0}', space=vmem, size = 0x1000, scoped, tag = 'output window, operand 0, single buffered']
    %8 = vsyncpa [#allocation3], 0
    %9 = vsyncpa [#allocation6], 0
    %10 = vsyncpa [#allocation4], 0
    // Predicated region
    $region2: #{tpu_custom_call.1} parent=1 // pred_check
      _
    $region3: #{tpu_custom_call.1} parent=1 // pred_check_branch
      %12 = sbr.rel (0) target = $region5
    $region4: #{tpu_custom_call.1} parent=1 // pred_region
      %s14 = ssub.s32 128, 128
      %15 = vsyncadd [#allocation3], %s14
      %s17 = sshll.u32 [#allocation2], 4
      %s18 = int_to_ptr.vmem [resolvable:$true] %s17
      %20 = dma.hbm_to_vmem [thread:$0]  %s0, 128, %s18, [#allocation3]
    $region5: #{tpu_custom_call.1} parent=1 // pred_fallthru
      _
    // Predicated region
    $region6: #{tpu_custom_call.1} parent=1 // pred_check
      _
    $region7: #{tpu_custom_call.1} parent=1 // pred_check_branch
      %22 = sbr.rel (0) target = $region9
    $region8: #{tpu_custom_call.1} parent=1 // pred_region
      %s24 = ssub.s32 4096, 4096
      %25 = vsyncadd [#allocation6], %s24
      %s26 = sshll.u32 [#allocation5], 4
      %s27 = int_to_ptr.vmem [resolvable:$true] %s26
      %32 = dma.hbm_to_vmem [thread:$0]  %s1, 4096, %s27, [#allocation6], 256, 256, 16
    $region9: #{tpu_custom_call.1} parent=1 // pred_fallthru
      _
    // Predicated region
    $region10: #{tpu_custom_call.1} parent=1 // pred_check
      _
    $region11: #{tpu_custom_call.1} parent=1 // pred_check_branch
      %34 = sbr.rel (0) target = $region13
    $region12: #{tpu_custom_call.1} parent=1 // pred_region
      _
    $region13: #{tpu_custom_call.1} parent=1 // pred_fallthru
      _
    // Predicated region
    $region14: #{tpu_custom_call.1} parent=1 // pred_check
      _
    $region15: #{tpu_custom_call.1} parent=1 // pred_check_branch
      %36 = sbr.rel (0) target = $region17
    $region16: #{tpu_custom_call.1} parent=1 // pred_region
      %37 = dma.done [#allocation3], 128
    $region17: #{tpu_custom_call.1} parent=1 // pred_fallthru
      _
    // Predicated region
    $region18: #{tpu_custom_call.1} parent=1 // pred_check
      _
    $region19: #{tpu_custom_call.1} parent=1 // pred_check_branch
      %39 = sbr.rel (0) target = $region21
    $region20: #{tpu_custom_call.1} parent=1 // pred_region
      %40 = dma.done [#allocation6], 4096
    $region21: #{tpu_custom_call.1} parent=1 // pred_fallthru
      _
    %v41 = vld [vmem:[#allocation2] sm:$0xff]
    %v42 = vld [vmem:[#allocation5] sm:$0xff]
    %v43 = vld [vmem:[#allocation5 + $0x8] sm:$0xff]
    %v44 = vld [vmem:[#allocation5 + $0x10] sm:$0xff]
    %v45 = vld [vmem:[#allocation5 + $0x18] sm:$0xff]
    %v46 = vld [vmem:[#allocation5 + $0x20] sm:$0xff]
    %v47 = vld [vmem:[#allocation5 + $0x28] sm:$0xff]
    %v48 = vld [vmem:[#allocation5 + $0x30] sm:$0xff]
    %v49 = vld [vmem:[#allocation5 + $0x38] sm:$0xff]
    %v50 = vld [vmem:[#allocation5 + $0x40] sm:$0xff]
    %v51 = vld [vmem:[#allocation5 + $0x48] sm:$0xff]
    %v52 = vld [vmem:[#allocation5 + $0x50] sm:$0xff]
    %v53 = vld [vmem:[#allocation5 + $0x58] sm:$0xff]
    %v54 = vld [vmem:[#allocation5 + $0x60] sm:$0xff]
    %v55 = vld [vmem:[#allocation5 + $0x68] sm:$0xff]
    %v56 = vld [vmem:[#allocation5 + $0x70] sm:$0xff]
    %v57 = vld [vmem:[#allocation5 + $0x78] sm:$0xff]
    %v58 = vld [vmem:[#allocation5 + $0x80] sm:$0xff]
    %v59 = vld [vmem:[#allocation5 + $0x88] sm:$0xff]
    %v60 = vld [vmem:[#allocation5 + $0x90] sm:$0xff]
    %v61 = vld [vmem:[#allocation5 + $0x98] sm:$0xff]
    %v62 = vld [vmem:[#allocation5 + $0xa0] sm:$0xff]
    %v63 = vld [vmem:[#allocation5 + $0xa8] sm:$0xff]
    %v64 = vld [vmem:[#allocation5 + $0xb0] sm:$0xff]
    %v65 = vld [vmem:[#allocation5 + $0xb8] sm:$0xff]
    %v66 = vld [vmem:[#allocation5 + $0xc0] sm:$0xff]
    %v67 = vld [vmem:[#allocation5 + $0xc8] sm:$0xff]
    %v68 = vld [vmem:[#allocation5 + $0xd0] sm:$0xff]
    %v69 = vld [vmem:[#allocation5 + $0xd8] sm:$0xff]
    %v70 = vld [vmem:[#allocation5 + $0xe0] sm:$0xff]
    %v71 = vld [vmem:[#allocation5 + $0xe8] sm:$0xff]
    %v72 = vld [vmem:[#allocation5 + $0xf0] sm:$0xff]
    %v73 = vld [vmem:[#allocation5 + $0xf8] sm:$0xff]
    %v74 = vld [vmem:[%s2] sm:$0x3]
    %v76 = vlaneseq
    %v77 = vshrl.u32 %v76, 7
    %v78 = vsub.s32 0, %v77
    %v79 = vrot.slane %v74, %v78
    %v80 = vlaneseq
    %v81 = vshrl.u32 %v80, 7
    %v82 = vsub.s32 1, %v81
    %v83 = vrot.slane %v74, %v82
    %86 = vmatprep.subr.mxu0 %v43
    %87 = vmatpush1.msra.mxu0 %v42
    %88 = vmatprep.subr.mxu0 %v45
    %89 = vmatpush1.msra.mxu0 %v44
    %90 = vmatprep.subr.mxu0 %v47
    %91 = vmatpush1.msra.mxu0 %v46
    %92 = vmatprep.subr.mxu0 %v49
    %93 = vmatpush1.msra.mxu0 %v48
    %94 = vmatprep.subr.mxu0 %v51
    %95 = vmatpush1.msra.mxu0 %v50
    %96 = vmatprep.subr.mxu0 %v53
    %97 = vmatpush1.msra.mxu0 %v52
    %98 = vmatprep.subr.mxu0 %v55
    %99 = vmatpush1.msra.mxu0 %v54
    %100 = vmatprep.subr.mxu0 %v57
    %101 = vmatpush1.msra.mxu0 %v56
    %102 = vmatprep.subr.mxu0 %v59
    %103 = vmatpush1.msra.mxu0 %v58
    %104 = vmatprep.subr.mxu0 %v61
    %105 = vmatpush1.msra.mxu0 %v60
    %106 = vmatprep.subr.mxu0 %v63
    %107 = vmatpush1.msra.mxu0 %v62
    %108 = vmatprep.subr.mxu0 %v65
    %109 = vmatpush1.msra.mxu0 %v64
    %110 = vmatprep.subr.mxu0 %v67
    %111 = vmatpush1.msra.mxu0 %v66
    %112 = vmatprep.subr.mxu0 %v69
    %113 = vmatpush1.msra.mxu0 %v68
    %114 = vmatprep.subr.mxu0 %v71
    %115 = vmatpush1.msra.mxu0 %v70
    %116 = vmatprep.subr.mxu0 %v73
    %117 = vmatpush1.msra.mxu0 %v72
    %118 = vmatprep.subr.mxu0 0.0
    %119 = vmatpush1.msra.mxu0 0.0
    %120 = vmatprep.subr.mxu0 0.0
    %121 = vmatpush1.msra.mxu0 0.0
    %122 = vmatprep.subr.mxu0 0.0
    %123 = vmatpush1.msra.mxu0 0.0
    %124 = vmatprep.subr.mxu0 0.0
    %125 = vmatpush1.msra.mxu0 0.0
    %126 = vmatprep.subr.mxu0 0.0
    %127 = vmatpush1.msra.mxu0 0.0
    %128 = vmatprep.subr.mxu0 0.0
    %129 = vmatpush1.msra.mxu0 0.0
    %130 = vmatprep.subr.mxu0 0.0
    %131 = vmatpush1.msra.mxu0 0.0
    %132 = vmatprep.subr.mxu0 0.0
    %133 = vmatpush1.msra.mxu0 0.0
    %134 = vmatprep.subr.mxu0 0.0
    %135 = vmatpush1.msra.mxu0 0.0
    %136 = vmatprep.subr.mxu0 0.0
    %137 = vmatpush1.msra.mxu0 0.0
    %138 = vmatprep.subr.mxu0 0.0
    %139 = vmatpush1.msra.mxu0 0.0
    %140 = vmatprep.subr.mxu0 0.0
    %141 = vmatpush1.msra.mxu0 0.0
    %142 = vmatprep.subr.mxu0 0.0
    %143 = vmatpush1.msra.mxu0 0.0
    %144 = vmatprep.subr.mxu0 0.0
    %145 = vmatpush1.msra.mxu0 0.0
    %146 = vmatprep.subr.mxu0 0.0
    %147 = vmatpush1.msra.mxu0 0.0
    %148 = vmatprep.subr.mxu0 0.0
    %149 = vmatpush1.msra.mxu0 0.0
    %150 = vmatprep.mubr.f32.mxu0 0.0
    %151 = vmatmul.mubr.f32.gmra.mrb[0].mxu0 %v41
    %v152 = vpop.f32.mrb[0].mxu0
    %v153 = vadd.f32 %v79, %v152
    %v154 = vpop.f32.mrb[0].mxu0
    %v155 = vadd.f32 %v83, %v154
    %156 = vdwg.mxu0
    %157 = vmax.xlane.f32.xlu0 %v153
    %v158 = vpop.xlane.xlu0 %157
    %v159 = vsub.f32 %v153, %v158
    %v160 = vmul.f32 %v159, 1.442695
    %v161 = vpow.pop %v160
    %162 = vadd.xlane.f32.xlu0 %v161
    %v163 = vpop.xlane.xlu0 %162
    %v164 = vrcp.pop %v163
    %v165 = vmul.f32 %v161, %v164
    %v166 = vadd.f32 %v41, %v165
    %167 = vmax.xlane.f32.xlu0 %v155
    %v168 = vpop.xlane.xlu0 %167
    %v169 = vsub.f32 %v155, %v168
    %v170 = vmul.f32 %v169, 1.442695
    %v171 = vpow.pop %v170
    %172 = vadd.xlane.f32.xlu0 %v171
    %v173 = vpop.xlane.xlu0 %172
    %v174 = vrcp.pop %v173
    %v175 = vmul.f32 %v171, %v174
    %v176 = vadd.f32 %v166, %v175
    %177 = vst [vmem:[#allocation7] sm:$0xff] %v176
    // Predicated region
    $region22: #{tpu_custom_call.1} parent=1 // pred_check
      _
    $region23: #{tpu_custom_call.1} parent=1 // pred_check_branch
      %179 = sbr.rel (0) target = $region25
    $region24: #{tpu_custom_call.1} parent=1 // pred_region
      %s181 = ssub.s32 128, 128
      %182 = vsyncadd [#allocation4], %s181
      %s184 = sshll.u32 [#allocation7], 4
      %s185 = int_to_ptr.vmem [resolvable:$true] %s184
      %187 = dma.vmem_to_hbm [thread:$0]  %s185, 128, %s3, [#allocation4]
    $region25: #{tpu_custom_call.1} parent=1 // pred_fallthru
      _
    // Predicated region
    $region26: #{tpu_custom_call.1} parent=1 // pred_check
      _
    $region27: #{tpu_custom_call.1} parent=1 // pred_check_branch
      %189 = sbr.rel (0) target = $region29
    $region28: #{tpu_custom_call.1} parent=1 // pred_region
      %190 = dma.done [#allocation4], 128
    $region29: #{tpu_custom_call.1} parent=1 // pred_fallthru
      _
    %191 = vsyncpa [#allocation3], 1
    %192 = vsyncpa [#allocation6], 1
    %193 = vsyncpa [#allocation4], 1

</llo_original>
